<compile_context>
chip_gen: v5e
topology: v5e:2x2
jax: 0.10.0
libtpu: 0.0.40
codegen_flags: <defaults>
</compile_context>

<pallas_src>
import math

import jax
import jax.numpy as jnp
from jax import lax
from jax.experimental import pallas as pl
from jax.experimental.pallas import tpu as pltpu


def _sigmoid(z):
    # tanh form: one EUP op instead of a VALU exp/divide chain; exact sigmoid.
    return 0.5 * (jnp.tanh(0.5 * z) + 1.0)


def net2_kernel(x_ref, w1_ref, b1_ref, w2_ref, b2_ref, w3_ref, b3_ref, o_ref):
    x = x_ref[...]                                   # (TB, 6): batch rows exactly as in HBM

    # fc1: contract the shared feature axis of w1 (10,6) and x (TB,6) -> (10, TB).
    # Transposed-RHS matmul (same pattern as attention q@k^T), so the x transpose is
    # folded into the MXU op instead of being a separate XLA pass over HBM.
    z1 = lax.dot_general(w1_ref[...], x, (((1,), (1,)), ((), ())),
                         preferred_element_type=jnp.float32) + b1_ref[...]
    h1 = _sigmoid(z1)                                # (10, TB) lane-dense

    # fc2: (5,10) @ (10,TB) -> (5,TB)
    z2 = jnp.dot(w2_ref[...], h1, preferred_element_type=jnp.float32) + b2_ref[...]
    h2 = _sigmoid(z2)                                # (5, TB)

    # fc3 (5 -> 1): broadcast-multiply + sublane reduce (VPU + XLU, skip the MXU).
    z3 = jnp.sum(w3_ref[...] * h2, axis=0, keepdims=True) + b3_ref[...]   # (1, TB)

    # sigmoid(z3) * 4/5*pi - 2*pi/5  ==  (2*pi/5) * tanh(z3 / 2)   (exact identity)
    o_ref[...] = (2.0 * math.pi / 5.0) * jnp.tanh(0.5 * z3)


def _round_up(n, m):
    return ((n + m - 1) // m) * m


def net2_forward(x, params, *, tb=None):
    """x: (B, 6) float32 -> (B, 1) float32."""
    w1, b1, w2, b2, w3, b3 = params
    B = x.shape[0]

    if tb is None:
        # Large lane tiles amortize the ~0.35us fixed cost per grid step (the
        # double-buffered footprint stays small), but keep >=4 steps when possible
        # so the "parallel" batch axis gives each v7x TensorCore >=2 pipelined steps.
        tb = max(256, min(4096, _round_up(pl.cdiv(B, 4), 256)))
    assert tb % 256 == 0, "tb must be a multiple of 256 (full-width MXU / vst lanes)"

    grid = (pl.cdiv(B, tb),)          # ragged tail handled by Pallas partial blocks

    const = lambda i: (0, 0)          # weights/biases stay VMEM-resident (no per-step DMA)
    grid_spec = pltpu.PrefetchScalarGridSpec(
        num_scalar_prefetch=0,
        grid=grid,
        in_specs=[
            pl.BlockSpec((tb, 6), lambda i: (i, 0)),    # contiguous HBM read, no wrapper x.T
            pl.BlockSpec((10, 6), const),
            pl.BlockSpec((10, 1), const),
            pl.BlockSpec((5, 10), const),
            pl.BlockSpec((5, 1), const),
            pl.BlockSpec((5, 1), const),
            pl.BlockSpec((1, 1), const),
        ],
        out_specs=pl.BlockSpec((1, tb), lambda i: (0, i)),   # lane-dense output strip
    )

    out = pl.pallas_call(
        net2_kernel,
        out_shape=jax.ShapeDtypeStruct((1, B), jnp.float32),
        grid_spec=grid_spec,
        compiler_params=pltpu.CompilerParams(
            dimension_semantics=("parallel",),
        ),
    )(x, w1, b1, w2, b2, w3, b3)

    # (1, B) -> (B, 1): same row-major layout, so this is a metadata reshape, not a copy.
    return out.reshape(B, 1)


def init_params(key):
    """Deterministic init mimicking PyTorch's default uniform(-1/sqrt(fan_in), +).

    Layout for the lane-dense kernel:
      w1: (10, 6), b1: (10, 1), w2: (5, 10), b2: (5, 1),
      w3: (5, 1)  [fc3 weight stored as an 'in'-major column], b3: (1, 1).
    """
    ks = jax.random.split(key, 6)

    def lin(kw, kb, fan_in, fan_out):
        bound = 1.0 / math.sqrt(fan_in)
        w = jax.random.uniform(kw, (fan_out, fan_in), jnp.float32, -bound, bound)
        b = jax.random.uniform(kb, (fan_out, 1), jnp.float32, -bound, bound)
        return w, b

    w1, b1 = lin(ks[0], ks[1], 6, 10)
    w2, b2 = lin(ks[2], ks[3], 10, 5)
    w3, b3 = lin(ks[4], ks[5], 5, 1)
    w3 = w3.reshape(5, 1)        # fc3 weight as a column for the VPU reduce
    return (w1, b1, w2, b2, w3, b3)


def net2_reference(x, params):
    """Pure-JAX reference (PyTorch semantics) for correctness check."""
    w1, b1, w2, b2, w3, b3 = params
    h = jax.nn.sigmoid(x @ w1.T + b1.T)
    h = jax.nn.sigmoid(h @ w2.T + b2.T)
    h = jax.nn.sigmoid(h @ w3 + b3.T)
    return h * 4.0 / 5.0 * math.pi - 2.0 * math.pi / 5.0


if __name__ == "__main__":
    key = jax.random.PRNGKey(0)
    kx, kp = jax.random.split(key)

    B = 1000  # deliberately NOT a multiple of the tile: exercises the pad-free ragged tail
    x = jax.random.normal(kx, (B, 6), dtype=jnp.float32)
    params = init_params(kp)

    out = net2_forward(x, params)     # auto tile -> tb=256, grid of 4 "parallel" steps
    out = jax.block_until_ready(out)

    ref = net2_reference(x, params)
    assert out.shape == (B, 1)
    assert jnp.allclose(out, ref, atol=1e-5, rtol=1e-5), (out, ref)

    print("KERNEL_OK")
</pallas_src>

<mosaic_0001>
module attributes {stable_mosaic.version = 11 : i64} {
  func.func @net2_kernel(%arg0: i32, %arg1: memref<256x6xf32, #tpu.memory_space<vmem>>, %arg2: memref<10x6xf32, #tpu.memory_space<vmem>>, %arg3: memref<10x1xf32, #tpu.memory_space<vmem>>, %arg4: memref<5x10xf32, #tpu.memory_space<vmem>>, %arg5: memref<5x1xf32, #tpu.memory_space<vmem>>, %arg6: memref<5x1xf32, #tpu.memory_space<vmem>>, %arg7: memref<1x1xf32, #tpu.memory_space<vmem>>, %arg8: memref<1x256xf32, #tpu.memory_space<vmem>>) attributes {dimension_semantics = [#tpu.dimension_semantics<parallel>], iteration_bounds = array<i64: 4>, scalar_prefetch = 0 : i64, scratch_operands = 0 : i64, tpu.core_type = #tpu.core_type<tc>, window_params = [{transform_indices = @transform_0, window_bounds = array<i64: 256, 6>}, {pipeline_mode = #tpu.pipeline_mode<synchronous>, transform_indices = @transform_1, window_bounds = array<i64: 10, 6>}, {pipeline_mode = #tpu.pipeline_mode<synchronous>, transform_indices = @transform_2, window_bounds = array<i64: 10, 1>}, {pipeline_mode = #tpu.pipeline_mode<synchronous>, transform_indices = @transform_3, window_bounds = array<i64: 5, 10>}, {pipeline_mode = #tpu.pipeline_mode<synchronous>, transform_indices = @transform_4, window_bounds = array<i64: 5, 1>}, {pipeline_mode = #tpu.pipeline_mode<synchronous>, transform_indices = @transform_5, window_bounds = array<i64: 5, 1>}, {pipeline_mode = #tpu.pipeline_mode<synchronous>, transform_indices = @transform_6, window_bounds = array<i64: 1, 1>}, {transform_indices = @transform_7, window_bounds = array<i64: 1, 256>}]} {
    %c0 = arith.constant 0 : index
    %c0_0 = arith.constant 0 : index
    %0 = vector.load %arg1[%c0, %c0_0] : memref<256x6xf32, #tpu.memory_space<vmem>>, vector<256x6xf32>
    %c0_1 = arith.constant 0 : index
    %c0_2 = arith.constant 0 : index
    %1 = vector.load %arg2[%c0_1, %c0_2] : memref<10x6xf32, #tpu.memory_space<vmem>>, vector<10x6xf32>
    %cst = arith.constant dense<0.000000e+00> : vector<10x256xf32>
    %2 = tpu.matmul %1, %0, %cst {dimension_numbers = #tpu.dot_dimension_numbers<[1], [1], [0], [0], [0, 0, 1, 0], [], []>} : vector<10x6xf32>, vector<256x6xf32>, vector<10x256xf32> -> vector<10x256xf32>
    %c0_3 = arith.constant 0 : index
    %c0_4 = arith.constant 0 : index
    %3 = vector.load %arg3[%c0_3, %c0_4] : memref<10x1xf32, #tpu.memory_space<vmem>>, vector<10x1xf32>
    %4 = vector.broadcast %3 : vector<10x1xf32> to vector<10x256xf32>
    %5 = arith.addf %2, %4 : vector<10x256xf32>
    %cst_5 = arith.constant 5.000000e-01 : f32
    %6 = vector.broadcast %cst_5 : f32 to vector<10x256xf32>
    %7 = arith.mulf %6, %5 : vector<10x256xf32>
    %8 = math.tanh %7 : vector<10x256xf32>
    %cst_6 = arith.constant 1.000000e+00 : f32
    %9 = vector.broadcast %cst_6 : f32 to vector<10x256xf32>
    %10 = arith.addf %8, %9 : vector<10x256xf32>
    %cst_7 = arith.constant 5.000000e-01 : f32
    %11 = vector.broadcast %cst_7 : f32 to vector<10x256xf32>
    %12 = arith.mulf %11, %10 : vector<10x256xf32>
    %c0_8 = arith.constant 0 : index
    %c0_9 = arith.constant 0 : index
    %13 = vector.load %arg4[%c0_8, %c0_9] : memref<5x10xf32, #tpu.memory_space<vmem>>, vector<5x10xf32>
    %cst_10 = arith.constant dense<0.000000e+00> : vector<5x256xf32>
    %14 = tpu.matmul %13, %12, %cst_10 {dimension_numbers = #tpu.dot_dimension_numbers<[1], [0], [0], [1], [0, 0, 1, 1], [], []>} : vector<5x10xf32>, vector<10x256xf32>, vector<5x256xf32> -> vector<5x256xf32>
    %c0_11 = arith.constant 0 : index
    %c0_12 = arith.constant 0 : index
    %15 = vector.load %arg5[%c0_11, %c0_12] : memref<5x1xf32, #tpu.memory_space<vmem>>, vector<5x1xf32>
    %16 = vector.broadcast %15 : vector<5x1xf32> to vector<5x256xf32>
    %17 = arith.addf %14, %16 : vector<5x256xf32>
    %cst_13 = arith.constant 5.000000e-01 : f32
    %18 = vector.broadcast %cst_13 : f32 to vector<5x256xf32>
    %19 = arith.mulf %18, %17 : vector<5x256xf32>
    %20 = math.tanh %19 : vector<5x256xf32>
    %cst_14 = arith.constant 1.000000e+00 : f32
    %21 = vector.broadcast %cst_14 : f32 to vector<5x256xf32>
    %22 = arith.addf %20, %21 : vector<5x256xf32>
    %cst_15 = arith.constant 5.000000e-01 : f32
    %23 = vector.broadcast %cst_15 : f32 to vector<5x256xf32>
    %24 = arith.mulf %23, %22 : vector<5x256xf32>
    %c0_16 = arith.constant 0 : index
    %c0_17 = arith.constant 0 : index
    %25 = vector.load %arg6[%c0_16, %c0_17] : memref<5x1xf32, #tpu.memory_space<vmem>>, vector<5x1xf32>
    %26 = vector.broadcast %25 : vector<5x1xf32> to vector<5x256xf32>
    %27 = arith.mulf %26, %24 : vector<5x256xf32>
    %cst_18 = arith.constant dense<0.000000e+00> : vector<256xf32>
    %28 = vector.multi_reduction <add>, %27, %cst_18 [0] : vector<5x256xf32> to vector<256xf32>
    %29 = vector.shape_cast %28 : vector<256xf32> to vector<1x256xf32>
    %c0_19 = arith.constant 0 : index
    %c0_20 = arith.constant 0 : index
    %30 = vector.load %arg7[%c0_19, %c0_20] : memref<1x1xf32, #tpu.memory_space<vmem>>, vector<1x1xf32>
    %31 = vector.broadcast %30 : vector<1x1xf32> to vector<1x256xf32>
    %32 = arith.addf %29, %31 : vector<1x256xf32>
    %cst_21 = arith.constant 5.000000e-01 : f32
    %33 = vector.broadcast %cst_21 : f32 to vector<1x256xf32>
    %34 = arith.mulf %33, %32 : vector<1x256xf32>
    %35 = math.tanh %34 : vector<1x256xf32>
    %cst_22 = arith.constant 1.2566371 : f32
    %36 = vector.broadcast %cst_22 : f32 to vector<1x256xf32>
    %37 = arith.mulf %36, %35 : vector<1x256xf32>
    %c0_23 = arith.constant 0 : index
    %c0_24 = arith.constant 0 : index
    %38 = vector.load %arg8[%c0_23, %c0_24] : memref<1x256xf32, #tpu.memory_space<vmem>>, vector<1x256xf32>
    tpu.vector_store %arg8[%c0_23, %c0_24], %37 {strides = array<i32>} : memref<1x256xf32, #tpu.memory_space<vmem>>, vector<1x256xf32>,
    return
  }
  func.func @transform_0(%arg0: i32) -> (i32, i32) {
    %c0_i32 = arith.constant 0 : i32
    %c0_i32_0 = arith.constant 0 : i32
    return %arg0, %c0_i32 : i32, i32
  }
  func.func @transform_1(%arg0: i32) -> (i32, i32) {
    %c0_i32 = arith.constant 0 : i32
    %c0_i32_0 = arith.constant 0 : i32
    %c0_i32_1 = arith.constant 0 : i32
    return %c0_i32, %c0_i32_0 : i32, i32
  }
  func.func @transform_2(%arg0: i32) -> (i32, i32) {
    %c0_i32 = arith.constant 0 : i32
    %c0_i32_0 = arith.constant 0 : i32
    %c0_i32_1 = arith.constant 0 : i32
    return %c0_i32, %c0_i32_0 : i32, i32
  }
  func.func @transform_3(%arg0: i32) -> (i32, i32) {
    %c0_i32 = arith.constant 0 : i32
    %c0_i32_0 = arith.constant 0 : i32
    %c0_i32_1 = arith.constant 0 : i32
    return %c0_i32, %c0_i32_0 : i32, i32
  }
  func.func @transform_4(%arg0: i32) -> (i32, i32) {
    %c0_i32 = arith.constant 0 : i32
    %c0_i32_0 = arith.constant 0 : i32
    %c0_i32_1 = arith.constant 0 : i32
    return %c0_i32, %c0_i32_0 : i32, i32
  }
  func.func @transform_5(%arg0: i32) -> (i32, i32) {
    %c0_i32 = arith.constant 0 : i32
    %c0_i32_0 = arith.constant 0 : i32
    %c0_i32_1 = arith.constant 0 : i32
    return %c0_i32, %c0_i32_0 : i32, i32
  }
  func.func @transform_6(%arg0: i32) -> (i32, i32) {
    %c0_i32 = arith.constant 0 : i32
    %c0_i32_0 = arith.constant 0 : i32
    %c0_i32_1 = arith.constant 0 : i32
    return %c0_i32, %c0_i32_0 : i32, i32
  }
  func.func @transform_7(%arg0: i32) -> (i32, i32) {
    %c0_i32 = arith.constant 0 : i32
    %c0_i32_0 = arith.constant 0 : i32
    return %c0_i32, %arg0 : i32, i32
  }
}

</mosaic_0001>

<llo_original>
// kernel: tpu_custom_call.1
$region0: #{tpu_custom_call.1}
  #allocation0 [shape = 'u32[]', space=smem, size = 0x4, offset = 0x4, fixed_abs, tag = 'smem constant byte address 0x4 - core index']
  #allocation1 [shape = 'u32[72,128]{1,0:T(1,128)}', space=vmem, size = 0x9000, scoped, tag = 'internal scratch']
  #allocation2 [shape = 'f32[1,1]{1,0:T(1,128)S(1)}', space=vmem, size = 0x200, scoped, tag = 'scoped memory for tpu_custom_call.1']
  %s0 = inlined_call_operand.vmem [shape: f32[1000,6], index: 0, kind: input, shape index: {}]
  %s1 = inlined_call_operand.vmem [shape: f32[10,6], index: 1, kind: input, shape index: {}]
  %s2 = inlined_call_operand.vmem [shape: f32[10,1], index: 2, kind: input, shape index: {}]
  %s3 = inlined_call_operand.vmem [shape: f32[5,10], index: 3, kind: input, shape index: {}]
  %s4 = inlined_call_operand.vmem [shape: f32[5,1], index: 4, kind: input, shape index: {}]
  %s5 = inlined_call_operand.vmem [shape: f32[5,1], index: 5, kind: input, shape index: {}]
  %s6 = inlined_call_operand.<no memory space> [shape: f32[1,1], index: 6, kind: input, shape index: {}]
  %s7 = inlined_call_operand.hbm [shape: f32[1,1000], index: 7, kind: output, shape index: {}]
  %s8 = sld [smem:[#allocation0]]
  $region61: #{tpu_custom_call.1} parent=0
    _
  %s10 = ssub.s32 1, %s8
  %s11 = scalar_select 0, %s10, %s8
  %v12 = vstv %s6
  %13 = vst [vmem:[#allocation2] sm:$0x1] %v12
  $region1: #{tpu_custom_call.1} parent=0
    #allocation3 [shape = 'u8[2048]{0}', space=vmem, size = 0x800, scoped, tag = 'output window, operand 0']
    #allocation4 [shape = 's32[2]{0}', space=sflag, size = 0x8, scoped, tag = 'scoped memory for tpu_custom_call.1']
    %14 = vsyncpa [#allocation4], 0
    %s15 = scalar_lea.sflag [#allocation4], 1
    %16 = vsyncpa %s15, 0
    loop: start=0, step=1, limit=6
    $region2: #{tpu_custom_call.1} parent=1 // loop_pre_header
      _
    $region3: #{tpu_custom_call.1} parent=1 // loop_header
      %s18 = sphi 0, %s22
      %p19 = scmp.ge.s32.totalorder %s18, 6
      %s28 = sphi 0, %s30
      %s31 = sphi 0, %s28
      %s32 = sphi 0, %s31
      %s48 = sphi 0, %s32
      %s52 = sphi 0, %s52
      %s54 = sphi 0, %s52
      %s55 = sphi 0, %s54
      %s69 = sphi 0, %s55
      %s73 = sphi 0, %s73
      %s75 = sphi 0, %s73
      %s76 = sphi 0, %s75
      %s90 = sphi 0, %s76
      %s94 = sphi 0, %s94
      %s96 = sphi 0, %s94
      %s97 = sphi 0, %s96
      %s111 = sphi 0, %s97
      %s115 = sphi 0, %s115
      %s117 = sphi 0, %s115
      %s118 = sphi 0, %s117
      %s132 = sphi 0, %s118
      %s136 = sphi 0, %s136
      %s138 = sphi 0, %s136
      %s139 = sphi 0, %s138
      %s153 = sphi 0, %s139
      %s157 = sphi 0, %s157
      %s159 = sphi 0, %s157
      %s160 = sphi 0, %s159
      %s174 = sphi 0, %s160
      %s180 = sphi 0, %s182
      %s183 = sphi 0, %s180
      %s184 = sphi 0, %s183
      %s200 = sphi 0, %s184
    $region4: #{tpu_custom_call.1} parent=1 // loop_header_branch
      %21 = sbr.rel (%p19) target = $region8
    $region5: #{tpu_custom_call.1} parent=1 // loop_body
      %s23 = ssub.s32 %s18, 1
      %s24 = ssub.s32 %s18, 2
      %s25 = sadd.s32 %s18, 1
      %s26 = ssub.s32 %s18, %s25
      %p27 = scmp.eq.s32.totalorder %s26, 0
      %s29 = sadd.s32 %s28, 1
      %s30 = scalar_select %p27, %s28, %s29
      %p33 = pneg %p27
      %p34 = scmp.eq.s32.totalorder %s18, 3
      %p35 = por %p33, %p34
      %p36 = scmp.ne.s32.totalorder %s28, %s31
      %p37 = scmp.eq.s32.totalorder %s18, 0
      %p38 = por %p36, %p37
      %p39 = scmp.ne.s32.totalorder %s28, %s31
      %p40 = scmp.eq.s32.totalorder %s23, 3
      %p41 = por %p39, %p40
      %p42 = scmp.ne.s32.totalorder %s31, %s32
      %p43 = scmp.eq.s32.totalorder %s23, 0
      %p44 = por %p42, %p43
      %p45 = scmp.ne.s32.totalorder %s31, %s32
      %p46 = scmp.eq.s32.totalorder %s24, 3
      %p47 = por %p45, %p46
      %p49 = scmp.ne.s32.totalorder %s32, %s48
      %p50 = scmp.eq.s32.totalorder %s24, 0
      %p51 = por %p49, %p50
      %s53 = sadd.s32 %s52, 1
      %p56 = scmp.eq.s32.totalorder %s18, 3
      %p57 = scmp.ne.s32.totalorder %s52, %s54
      %p58 = scmp.eq.s32.totalorder %s18, 0
      %p59 = por %p57, %p58
      %p60 = scmp.ne.s32.totalorder %s52, %s54
      %p61 = scmp.eq.s32.totalorder %s23, 3
      %p62 = por %p60, %p61
      %p63 = scmp.ne.s32.totalorder %s54, %s55
      %p64 = scmp.eq.s32.totalorder %s23, 0
      %p65 = por %p63, %p64
      %p66 = scmp.ne.s32.totalorder %s54, %s55
      %p67 = scmp.eq.s32.totalorder %s24, 3
      %p68 = por %p66, %p67
      %p70 = scmp.ne.s32.totalorder %s55, %s69
      %p71 = scmp.eq.s32.totalorder %s24, 0
      %p72 = por %p70, %p71
      %s74 = sadd.s32 %s73, 1
      %p77 = scmp.eq.s32.totalorder %s18, 3
      %p78 = scmp.ne.s32.totalorder %s73, %s75
      %p79 = scmp.eq.s32.totalorder %s18, 0
      %p80 = por %p78, %p79
      %p81 = scmp.ne.s32.totalorder %s73, %s75
      %p82 = scmp.eq.s32.totalorder %s23, 3
      %p83 = por %p81, %p82
      %p84 = scmp.ne.s32.totalorder %s75, %s76
      %p85 = scmp.eq.s32.totalorder %s23, 0
      %p86 = por %p84, %p85
      %p87 = scmp.ne.s32.totalorder %s75, %s76
      %p88 = scmp.eq.s32.totalorder %s24, 3
      %p89 = por %p87, %p88
      %p91 = scmp.ne.s32.totalorder %s76, %s90
      %p92 = scmp.eq.s32.totalorder %s24, 0
      %p93 = por %p91, %p92
      %s95 = sadd.s32 %s94, 1
      %p98 = scmp.eq.s32.totalorder %s18, 3
      %p99 = scmp.ne.s32.totalorder %s94, %s96
      %p100 = scmp.eq.s32.totalorder %s18, 0
      %p101 = por %p99, %p100
      %p102 = scmp.ne.s32.totalorder %s94, %s96
      %p103 = scmp.eq.s32.totalorder %s23, 3
      %p104 = por %p102, %p103
      %p105 = scmp.ne.s32.totalorder %s96, %s97
      %p106 = scmp.eq.s32.totalorder %s23, 0
      %p107 = por %p105, %p106
      %p108 = scmp.ne.s32.totalorder %s96, %s97
      %p109 = scmp.eq.s32.totalorder %s24, 3
      %p110 = por %p108, %p109
      %p112 = scmp.ne.s32.totalorder %s97, %s111
      %p113 = scmp.eq.s32.totalorder %s24, 0
      %p114 = por %p112, %p113
      %s116 = sadd.s32 %s115, 1
      %p119 = scmp.eq.s32.totalorder %s18, 3
      %p120 = scmp.ne.s32.totalorder %s115, %s117
      %p121 = scmp.eq.s32.totalorder %s18, 0
      %p122 = por %p120, %p121
      %p123 = scmp.ne.s32.totalorder %s115, %s117
      %p124 = scmp.eq.s32.totalorder %s23, 3
      %p125 = por %p123, %p124
      %p126 = scmp.ne.s32.totalorder %s117, %s118
      %p127 = scmp.eq.s32.totalorder %s23, 0
      %p128 = por %p126, %p127
      %p129 = scmp.ne.s32.totalorder %s117, %s118
      %p130 = scmp.eq.s32.totalorder %s24, 3
      %p131 = por %p129, %p130
      %p133 = scmp.ne.s32.totalorder %s118, %s132
      %p134 = scmp.eq.s32.totalorder %s24, 0
      %p135 = por %p133, %p134
      %s137 = sadd.s32 %s136, 1
      %p140 = scmp.eq.s32.totalorder %s18, 3
      %p141 = scmp.ne.s32.totalorder %s136, %s138
      %p142 = scmp.eq.s32.totalorder %s18, 0
      %p143 = por %p141, %p142
      %p144 = scmp.ne.s32.totalorder %s136, %s138
      %p145 = scmp.eq.s32.totalorder %s23, 3
      %p146 = por %p144, %p145
      %p147 = scmp.ne.s32.totalorder %s138, %s139
      %p148 = scmp.eq.s32.totalorder %s23, 0
      %p149 = por %p147, %p148
      %p150 = scmp.ne.s32.totalorder %s138, %s139
      %p151 = scmp.eq.s32.totalorder %s24, 3
      %p152 = por %p150, %p151
      %p154 = scmp.ne.s32.totalorder %s139, %s153
      %p155 = scmp.eq.s32.totalorder %s24, 0
      %p156 = por %p154, %p155
      %s158 = sadd.s32 %s157, 1
      %p161 = scmp.eq.s32.totalorder %s18, 3
      %p162 = scmp.ne.s32.totalorder %s157, %s159
      %p163 = scmp.eq.s32.totalorder %s18, 0
      %p164 = por %p162, %p163
      %p165 = scmp.ne.s32.totalorder %s157, %s159
      %p166 = scmp.eq.s32.totalorder %s23, 3
      %p167 = por %p165, %p166
      %p168 = scmp.ne.s32.totalorder %s159, %s160
      %p169 = scmp.eq.s32.totalorder %s23, 0
      %p170 = por %p168, %p169
      %p171 = scmp.ne.s32.totalorder %s159, %s160
      %p172 = scmp.eq.s32.totalorder %s24, 3
      %p173 = por %p171, %p172
      %p175 = scmp.ne.s32.totalorder %s160, %s174
      %p176 = scmp.eq.s32.totalorder %s24, 0
      %p177 = por %p175, %p176
      %s178 = ssub.s32 %s18, %s25
      %p179 = scmp.eq.s32.totalorder %s178, 0
      %s181 = sadd.s32 %s180, 1
      %s182 = scalar_select %p179, %s180, %s181
      %p185 = pneg %p179
      %p186 = scmp.eq.s32.totalorder %s18, 3
      %p187 = por %p185, %p186
      %p188 = scmp.ne.s32.totalorder %s180, %s183
      %p189 = scmp.eq.s32.totalorder %s18, 0
      %p190 = por %p188, %p189
      %p191 = scmp.ne.s32.totalorder %s180, %s183
      %p192 = scmp.eq.s32.totalorder %s23, 3
      %p193 = por %p191, %p192
      %p194 = scmp.ne.s32.totalorder %s183, %s184
      %p195 = scmp.eq.s32.totalorder %s23, 0
      %p196 = por %p194, %p195
      %p197 = scmp.ne.s32.totalorder %s183, %s184
      %p198 = scmp.eq.s32.totalorder %s24, 3
      %p199 = por %p197, %p198
      %p201 = scmp.ne.s32.totalorder %s184, %s200
      %p202 = scmp.eq.s32.totalorder %s24, 0
      %p203 = por %p201, %p202
      %p204 = scmp.le.s32.totalorder 1, %s18
      %p205 = scmp.lt.s32.totalorder %s18, 5
      %p206 = pnand %p204, %p205
      %p207 = pneg %p206
      // Predicated region
      $region9: #{tpu_custom_call.1} parent=5 // pred_check
        _
      $region10: #{tpu_custom_call.1} parent=5 // pred_check_branch
        %209 = sbr.rel (%p206) target = $region12
      $region11: #{tpu_custom_call.1} parent=5 // pred_region
        %s210 = ssub.s32 %s18, 1
        // Predicated region
        $region13: #{tpu_custom_call.1} parent=11 // pred_check
          %p211 = pneg %p65
        $region14: #{tpu_custom_call.1} parent=11 // pred_check_branch
          %213 = sbr.rel (%p211) target = $region16
        $region15: #{tpu_custom_call.1} parent=11 // pred_region
          _
        $region16: #{tpu_custom_call.1} parent=11 // pred_fallthru
          _
        // Predicated region
        $region17: #{tpu_custom_call.1} parent=11 // pred_check
          %p214 = pneg %p86
        $region18: #{tpu_custom_call.1} parent=11 // pred_check_branch
          %216 = sbr.rel (%p214) target = $region20
        $region19: #{tpu_custom_call.1} parent=11 // pred_region
          _
        $region20: #{tpu_custom_call.1} parent=11 // pred_fallthru
          _
        // Predicated region
        $region21: #{tpu_custom_call.1} parent=11 // pred_check
          %p217 = pneg %p107
        $region22: #{tpu_custom_call.1} parent=11 // pred_check_branch
          %219 = sbr.rel (%p217) target = $region24
        $region23: #{tpu_custom_call.1} parent=11 // pred_region
          _
        $region24: #{tpu_custom_call.1} parent=11 // pred_fallthru
          _
        // Predicated region
        $region25: #{tpu_custom_call.1} parent=11 // pred_check
          %p220 = pneg %p128
        $region26: #{tpu_custom_call.1} parent=11 // pred_check_branch
          %222 = sbr.rel (%p220) target = $region28
        $region27: #{tpu_custom_call.1} parent=11 // pred_region
          _
        $region28: #{tpu_custom_call.1} parent=11 // pred_fallthru
          _
        // Predicated region
        $region29: #{tpu_custom_call.1} parent=11 // pred_check
          %p223 = pneg %p149
        $region30: #{tpu_custom_call.1} parent=11 // pred_check_branch
          %225 = sbr.rel (%p223) target = $region32
        $region31: #{tpu_custom_call.1} parent=11 // pred_region
          _
        $region32: #{tpu_custom_call.1} parent=11 // pred_fallthru
          _
        // Predicated region
        $region33: #{tpu_custom_call.1} parent=11 // pred_check
          %p226 = pneg %p170
        $region34: #{tpu_custom_call.1} parent=11 // pred_check_branch
          %228 = sbr.rel (%p226) target = $region36
        $region35: #{tpu_custom_call.1} parent=11 // pred_region
          _
        $region36: #{tpu_custom_call.1} parent=11 // pred_fallthru
          _
      $region12: #{tpu_custom_call.1} parent=5 // pred_fallthru
        _
      %p229 = scmp.lt.s32.totalorder %s18, 4
      // Predicated region
      $region37: #{tpu_custom_call.1} parent=5 // pred_check
        %p230 = pneg %p229
      $region38: #{tpu_custom_call.1} parent=5 // pred_check_branch
        %232 = sbr.rel (%p230) target = $region40
      $region39: #{tpu_custom_call.1} parent=5 // pred_region
        // Predicated region
        $region41: #{tpu_custom_call.1} parent=39 // pred_check
          %p233 = pneg %p38
        $region42: #{tpu_custom_call.1} parent=39 // pred_check_branch
          %235 = sbr.rel (%p233) target = $region44
        $region43: #{tpu_custom_call.1} parent=39 // pred_region
          %s236 = smul.u32 32, %s18
          %s237 = ssub.s32 125, %s236
          %p238 = scmp.lt.s32.totalorder %s237, 32
          %s239 = scalar_select %p238, %s237, 32
          %s240 = smul.u32 8, %s239
          %p241 = scmp.lt.s32.totalorder %s236, 124
          %s242 = scalar_select %p241, %s236, 124
          %s243 = smul.addr %s242, 8
          %s244 = scalar_lea.vmem %s0, %s243
          %s245 = smul.u32 32, %s18
          %s246 = ssub.s32 125, %s245
          %p247 = scmp.lt.s32.totalorder %s246, 32
          %s248 = scalar_select %p247, %s246, 32
          %s249 = smul.u32 8, %s248
        $region44: #{tpu_custom_call.1} parent=39 // pred_fallthru
          _
      $region40: #{tpu_custom_call.1} parent=5 // pred_fallthru
        _
      %p250 = scmp.le.s32.totalorder 1, %s18
      %p251 = scmp.lt.s32.totalorder %s18, 5
      %p252 = pnand %p250, %p251
      %p253 = pneg %p252
      // Predicated region
      $region45: #{tpu_custom_call.1} parent=5 // pred_check
        _
      $region46: #{tpu_custom_call.1} parent=5 // pred_check_branch
        %255 = sbr.rel (%p252) target = $region48
      $region47: #{tpu_custom_call.1} parent=5 // pred_region
        %s256 = ssub.s32 %s18, 1
        %s257 = smul.u32 32, %s23
        %s258 = ssub.s32 125, %s257
        %p259 = scmp.lt.s32.totalorder %s258, 32
        %s260 = scalar_select %p259, %s258, 32
        %s261 = smul.u32 8, %s260
        %p262 = scmp.lt.s32.totalorder %s257, 124
        %s263 = scalar_select %p262, %s257, 124
        %s264 = smul.addr %s263, 8
        %s265 = scalar_lea.vmem %s0, %s264
        %p266 = pneg %p44
        %p267 = pneg %p41
        %p268 = pneg %p65
        %p269 = pneg %p62
        %p270 = pneg %p86
        %p271 = pneg %p83
        %p272 = pneg %p107
        %p273 = pneg %p104
        %p274 = pneg %p128
        %p275 = pneg %p125
        %p276 = pneg %p149
        %p277 = pneg %p146
        %p278 = pneg %p170
        %p279 = pneg %p167
        %p280 = pneg %p196
        %p281 = pneg %p193
        %s282 = sand.u32 %s183, 1
        %s283 = scalar_lea.sflag [#allocation4], %s282
        %s284 = sand.u32 %s183, 1
        %s285 = smul.addr %s284, 2
        %s286 = scalar_lea.vmem [#allocation3], %s285
        %s287 = smul.u32 32, %s23
        %s288 = ssub.s32 125, %s287
        %p289 = scmp.lt.s32.totalorder %s288, 32
        %s290 = scalar_select %p289, %s288, 32
        %s291 = smul.u32 8, %s290
        %p292 = scmp.lt.s32.totalorder %s287, 124
        %s293 = scalar_select %p292, %s287, 124
        %s294 = smul.addr %s293, 8
        %s295 = scalar_lea.vmem %s0, %s294
        %s296 = smul.u32 32, %s23
        %s297 = ssub.s32 125, %s296
        %p298 = scmp.lt.s32.totalorder %s297, 32
        %s299 = scalar_select %p298, %s297, 32
        %s300 = smul.u32 8, %s299
        %s301 = smul.u32 2, %s23
        %v302 = vld [vmem:[%s295] sm:$0xff]
        %v303 = vld [vmem:[%s295 + $0x8] sm:$0xff]
        %v304 = vld [vmem:[%s295 + $0x10] sm:$0xff]
        %v305 = vld [vmem:[%s295 + $0x18] sm:$0xff]
        %v306 = vld [vmem:[%s295 + $0x20] sm:$0xff]
        %v307 = vld [vmem:[%s295 + $0x28] sm:$0xff]
        %v308 = vld [vmem:[%s295 + $0x30] sm:$0xff]
        %v309 = vld [vmem:[%s295 + $0x38] sm:$0xff]
        %v310 = vld [vmem:[%s295 + $0x40] sm:$0xff]
        %v311 = vld [vmem:[%s295 + $0x48] sm:$0xff]
        %v312 = vld [vmem:[%s295 + $0x50] sm:$0xff]
        %v313 = vld [vmem:[%s295 + $0x58] sm:$0xff]
        %v314 = vld [vmem:[%s295 + $0x60] sm:$0xff]
        %v315 = vld [vmem:[%s295 + $0x68] sm:$0xff]
        %v316 = vld [vmem:[%s295 + $0x70] sm:$0xff]
        %v317 = vld [vmem:[%s295 + $0x78] sm:$0xff]
        %v318 = vld [vmem:[%s295 + $0x80] sm:$0xff]
        %v319 = vld [vmem:[%s295 + $0x88] sm:$0xff]
        %v320 = vld [vmem:[%s295 + $0x90] sm:$0xff]
        %v321 = vld [vmem:[%s295 + $0x98] sm:$0xff]
        %v322 = vld [vmem:[%s295 + $0xa0] sm:$0xff]
        %v323 = vld [vmem:[%s295 + $0xa8] sm:$0xff]
        %v324 = vld [vmem:[%s295 + $0xb0] sm:$0xff]
        %v325 = vld [vmem:[%s295 + $0xb8] sm:$0xff]
        %v326 = vld [vmem:[%s295 + $0xc0] sm:$0xff]
        %v327 = vld [vmem:[%s295 + $0xc8] sm:$0xff]
        %v328 = vld [vmem:[%s295 + $0xd0] sm:$0xff]
        %v329 = vld [vmem:[%s295 + $0xd8] sm:$0xff]
        %v330 = vld [vmem:[%s295 + $0xe0] sm:$0xff]
        %v331 = vld [vmem:[%s295 + $0xe8] sm:$0xff]
        %v332 = vld [vmem:[%s295 + $0xf0] sm:$0xff]
        %v333 = vld [vmem:[%s295 + $0xf8] sm:$0xff]
        %v334 = vld [vmem:[%s1] sm:$0xff]
        %v335 = vld [vmem:[%s1 + $0x8] sm:$0x3]
        %v336 = vld [vmem:[%s2] sm:$0xff]
        %v337 = vld [vmem:[%s2 + $0x8] sm:$0x3]
        %339 = vset.pattern.permute.xlu0 0
        %340 = vperm.xlu0 %339, %v336
        %v341 = vpop.permute.xlu0 %340
        %344 = vset.pattern.permute.xlu0 0
        %345 = vperm.xlu0 %344, %v337
        %v346 = vpop.permute.xlu0 %345
        %vm348 = vcmask 48128
        %v350 = vsel %vm348, %v334, 0
        %v353 = vsel %vm348, %v335, 0
        %v356 = vsel %vm348, %v302, 0
        %v359 = vsel %vm348, %v303, 0
        %v362 = vsel %vm348, %v304, 0
        %v365 = vsel %vm348, %v305, 0
        %v368 = vsel %vm348, %v306, 0
        %v371 = vsel %vm348, %v307, 0
        %v374 = vsel %vm348, %v308, 0
        %v377 = vsel %vm348, %v309, 0
        %v380 = vsel %vm348, %v310, 0
        %v383 = vsel %vm348, %v311, 0
        %v386 = vsel %vm348, %v312, 0
        %v389 = vsel %vm348, %v313, 0
        %v392 = vsel %vm348, %v314, 0
        %v395 = vsel %vm348, %v315, 0
        %v398 = vsel %vm348, %v316, 0
        %v401 = vsel %vm348, %v317, 0
        %v404 = vsel %vm348, %v318, 0
        %v407 = vsel %vm348, %v319, 0
        %v410 = vsel %vm348, %v320, 0
        %v413 = vsel %vm348, %v321, 0
        %v416 = vsel %vm348, %v322, 0
        %v419 = vsel %vm348, %v323, 0
        %v422 = vsel %vm348, %v324, 0
        %v425 = vsel %vm348, %v325, 0
        %v428 = vsel %vm348, %v326, 0
        %v431 = vsel %vm348, %v327, 0
        %v434 = vsel %vm348, %v328, 0
        %v437 = vsel %vm348, %v329, 0
        %v440 = vsel %vm348, %v330, 0
        %v443 = vsel %vm348, %v331, 0
        %v446 = vsel %vm348, %v332, 0
        %v449 = vsel %vm348, %v333, 0
        %451 = vmatpush.xpose.msra.mxu0 %v401
        %452 = vmatpush.xpose.msra.mxu0 %v398
        %453 = vmatpush.xpose.msra.mxu0 %v395
        %454 = vmatpush.xpose.msra.mxu0 %v392
        %455 = vmatpush.xpose.msra.mxu0 %v389
        %456 = vmatpush.xpose.msra.mxu0 %v386
        %457 = vmatpush.xpose.msra.mxu0 %v383
        %458 = vmatpush.xpose.msra.mxu0 %v380
        %459 = vmatpush.xpose.msra.mxu0 %v377
        %460 = vmatpush.xpose.msra.mxu0 %v374
        %461 = vmatpush.xpose.msra.mxu0 %v371
        %462 = vmatpush.xpose.msra.mxu0 %v368
        %463 = vmatpush.xpose.msra.mxu0 %v365
        %464 = vmatpush.xpose.msra.mxu0 %v362
        %465 = vmatpush.xpose.msra.mxu0 %v359
        %466 = vmatpush.xpose.msra.mxu0 %v356
        %467 = vmatmul.f32.gmra.mxu0 %v350
        %v468 = vpop.f32.mrf.mxu0
        %v469 = vadd.f32 %v341, %v468
        %470 = vmatmul.f32.gmra.mxu0 %v353
        %v471 = vpop.f32.mrf.mxu0
        %v472 = vadd.f32 %v346, %v471
        %473 = vdwg.mxu0
        %474 = vmatpush.xpose.msra.mxu0 %v449
        %475 = vmatpush.xpose.msra.mxu0 %v446
        %476 = vmatpush.xpose.msra.mxu0 %v443
        %477 = vmatpush.xpose.msra.mxu0 %v440
        %478 = vmatpush.xpose.msra.mxu0 %v437
        %479 = vmatpush.xpose.msra.mxu0 %v434
        %480 = vmatpush.xpose.msra.mxu0 %v431
        %481 = vmatpush.xpose.msra.mxu0 %v428
        %482 = vmatpush.xpose.msra.mxu0 %v425
        %483 = vmatpush.xpose.msra.mxu0 %v422
        %484 = vmatpush.xpose.msra.mxu0 %v419
        %485 = vmatpush.xpose.msra.mxu0 %v416
        %486 = vmatpush.xpose.msra.mxu0 %v413
        %487 = vmatpush.xpose.msra.mxu0 %v410
        %488 = vmatpush.xpose.msra.mxu0 %v407
        %489 = vmatpush.xpose.msra.mxu0 %v404
        %490 = vmatmul.f32.gmra.mxu0 %v350
        %v491 = vpop.f32.mrf.mxu0
        %v492 = vadd.f32 %v341, %v491
        %493 = vmatmul.f32.gmra.mxu0 %v353
        %v494 = vpop.f32.mrf.mxu0
        %v495 = vadd.f32 %v346, %v494
        %496 = vdwg.mxu0
        %v497 = vmul.f32 %v469, 0.5
        %v498 = vmul.f32 %v492, 0.5
        %v499 = vmul.f32 %v472, 0.5
        %v500 = vmul.f32 %v495, 0.5
        %v501 = vtanh.pop %v497
        %v502 = vtanh.pop %v498
        %v503 = vtanh.pop %v499
        %v504 = vtanh.pop %v500
        %v505 = vadd.f32 %v501, 1.0
        %v506 = vadd.f32 %v502, 1.0
        %v507 = vadd.f32 %v503, 1.0
        %v508 = vadd.f32 %v504, 1.0
        %v509 = vmul.f32 %v505, 0.5
        %v510 = vmul.f32 %v506, 0.5
        %v511 = vmul.f32 %v507, 0.5
        %v512 = vmul.f32 %v508, 0.5
        %v513 = vld [vmem:[%s3] sm:$0x1f]
        %v514 = vld [vmem:[%s4] sm:$0x1f]
        %516 = vset.pattern.permute.xlu0 0
        %517 = vperm.xlu0 %516, %v514
        %v518 = vpop.permute.xlu0 %517
        %vm520 = vcmask 80896
        %v522 = vsel %vm520, %v513, 0
        %vm524 = vcmask 1041408
        %v526 = vsel %vm524, %v511, 0
        %v529 = vsel %vm524, %v512, 0
        %531 = vmatpush.msra.mxu0 0.0
        %532 = vmatpush.msra.mxu0 0.0
        %533 = vmatpush.msra.mxu0 0.0
        %534 = vmatpush.msra.mxu0 0.0
        %535 = vmatpush.msra.mxu0 0.0
        %536 = vmatpush.msra.mxu0 0.0
        %537 = vmatpush.msra.mxu0 0.0
        %538 = vmatpush.msra.mxu0 0.0
        %539 = vmatpush.msra.mxu0 0.0
        %540 = vmatpush.msra.mxu0 0.0
        %541 = vmatpush.msra.mxu0 0.0
        %542 = vmatpush.msra.mxu0 0.0
        %543 = vmatpush.msra.mxu0 0.0
        %544 = vmatpush.msra.mxu0 0.0
        %545 = vmatpush.msra.mxu0 %v526
        %546 = vmatpush.msra.mxu0 %v509
        %547 = vmatmul.f32.gmra.mxu0 %v522
        %v548 = vpop.f32.mrf.mxu0
        %v549 = vadd.f32 %v518, %v548
        %550 = vdwg.mxu0
        %551 = vmatpush.msra.mxu0 0.0
        %552 = vmatpush.msra.mxu0 0.0
        %553 = vmatpush.msra.mxu0 0.0
        %554 = vmatpush.msra.mxu0 0.0
        %555 = vmatpush.msra.mxu0 0.0
        %556 = vmatpush.msra.mxu0 0.0
        %557 = vmatpush.msra.mxu0 0.0
        %558 = vmatpush.msra.mxu0 0.0
        %559 = vmatpush.msra.mxu0 0.0
        %560 = vmatpush.msra.mxu0 0.0
        %561 = vmatpush.msra.mxu0 0.0
        %562 = vmatpush.msra.mxu0 0.0
        %563 = vmatpush.msra.mxu0 0.0
        %564 = vmatpush.msra.mxu0 0.0
        %565 = vmatpush.msra.mxu0 %v529
        %566 = vmatpush.msra.mxu0 %v510
        %567 = vmatmul.f32.gmra.mxu0 %v522
        %v568 = vpop.f32.mrf.mxu0
        %v569 = vadd.f32 %v518, %v568
        %570 = vdwg.mxu0
        %v571 = vmul.f32 %v549, 0.5
        %v572 = vmul.f32 %v569, 0.5
        %v573 = vtanh.pop %v571
        %v574 = vtanh.pop %v572
        %v575 = vadd.f32 %v573, 1.0
        %v576 = vadd.f32 %v574, 1.0
        %v577 = vmul.f32 %v575, 0.5
        %v578 = vmul.f32 %v576, 0.5
        %v579 = vld [vmem:[%s5] sm:$0x1f]
        %581 = vset.pattern.permute.xlu0 0
        %582 = vperm.xlu0 %581, %v579
        %v583 = vpop.permute.xlu0 %582
        %v585 = vmul.f32 %v583, %v577
        %v586 = vmul.f32 %v583, %v578
        %vm587 = vcmask 1044480
        %v588 = vsel %vm587, %v585, 0.0
        %v589 = vrot.slane %v588, 4
        %v590 = vadd.f32 %v588, %v589
        %v591 = vrot.slane %v590, 2
        %v592 = vadd.f32 %v590, %v591
        %v593 = vrot.slane %v592, 1
        %v594 = vadd.f32 %v592, %v593
        %v595 = vsel %vm587, %v586, 0.0
        %v596 = vrot.slane %v595, 4
        %v597 = vadd.f32 %v595, %v596
        %v598 = vrot.slane %v597, 2
        %v599 = vadd.f32 %v597, %v598
        %v600 = vrot.slane %v599, 1
        %v601 = vadd.f32 %v599, %v600
        %v602 = vld [vmem:[#allocation2] sm:$0x1]
        %604 = vset.pattern.permute.xlu0 0
        %605 = vperm.xlu0 %604, %v602
        %v606 = vpop.permute.xlu0 %605
        %v608 = vperm.slane %v606, 0
        %v609 = vadd.f32 %v594, %v608
        %v610 = vadd.f32 %v601, %v608
        %v611 = vmul.f32 %v609, 0.5
        %v612 = vmul.f32 %v610, 0.5
        %v613 = vtanh.pop %v611
        %v614 = vtanh.pop %v612
        %v615 = vmul.f32 %v613, 1.2566371
        %v616 = vmul.f32 %v614, 1.2566371
        %v619 = vrot.slane %v616, 7
        %vm620 = vcmask 1040384
        %v621 = vsel %vm620, %v615, %v619
        %v623 = vlaneseq
        %vm624 = vcmp.ge.s32.totalorder %v623, 0
        %vm625 = vcmp.lt.s32.totalorder %v623, 256
        %vm626 = vmand %vm624, %vm625
        %627 = vst.msk [vmem:[%s286] sm:$0x3] %vm626, %v621
        %s628 = sand.u32 %s183, 1
        %s629 = scalar_lea.sflag [#allocation4], %s628
        %s630 = sand.u32 %s183, 1
        %s631 = smul.addr %s630, 2
        %s632 = scalar_lea.vmem [#allocation3], %s631
        // Predicated region
        $region49: #{tpu_custom_call.1} parent=47 // pred_check
          %p633 = pneg %p193
        $region50: #{tpu_custom_call.1} parent=47 // pred_check_branch
          %635 = sbr.rel (%p633) target = $region52
        $region51: #{tpu_custom_call.1} parent=47 // pred_region
          %s636 = smul.u32 2, %s23
          %638 = vsyncadd %s629, 0
          %s639 = scalar_lea.hbm %s7, %s636
          %s641 = sshll.u32 %s632, 4
          %s642 = int_to_ptr.vmem [resolvable:$true] %s641
          %s643 = sshll.u32 %s639, 4
          %s644 = int_to_ptr.hbm [resolvable:$true] %s643
          %646 = dma.vmem_to_hbm [thread:$0]  %s642, 32, %s644, %s629
        $region52: #{tpu_custom_call.1} parent=47 // pred_fallthru
          _
      $region48: #{tpu_custom_call.1} parent=5 // pred_fallthru
        _
      %p647 = scmp.le.s32.totalorder 2, %s18
      // Predicated region
      $region53: #{tpu_custom_call.1} parent=5 // pred_check
        %p648 = pneg %p647
      $region54: #{tpu_custom_call.1} parent=5 // pred_check_branch
        %650 = sbr.rel (%p648) target = $region56
      $region55: #{tpu_custom_call.1} parent=5 // pred_region
        %s651 = ssub.s32 %s18, 2
        // Predicated region
        $region57: #{tpu_custom_call.1} parent=55 // pred_check
          %p652 = pneg %p199
        $region58: #{tpu_custom_call.1} parent=55 // pred_check_branch
          %654 = sbr.rel (%p652) target = $region60
        $region59: #{tpu_custom_call.1} parent=55 // pred_region
          %s655 = sand.u32 %s184, 1
          %s656 = scalar_lea.sflag [#allocation4], %s655
          %s657 = sand.u32 %s184, 1
          %s658 = smul.addr %s657, 2
          %s659 = scalar_lea.vmem [#allocation3], %s658
          %661 = dma.done %s656, 32
        $region60: #{tpu_custom_call.1} parent=55 // pred_fallthru
          _
      $region56: #{tpu_custom_call.1} parent=5 // pred_fallthru
        _
    $region6: #{tpu_custom_call.1} parent=1 // loop_footer
      %s22 = sadd.s32 1, %s18
    $region7: #{tpu_custom_call.1} parent=1 // loop_footer_branch
      %17 = sbr.rel target = $region3
    $region8: #{tpu_custom_call.1} parent=1 // loop_exit
      _
    %662 = vsyncpa [#allocation4], 1
    %s663 = scalar_lea.sflag [#allocation4], 1
    %664 = vsyncpa %s663, 1

</llo_original>
